<compile_context>
chip_gen: v7x
topology: tpu7x:2x2x1
jax: 0.10.0
libtpu: 0.0.40
codegen_flags: <defaults>
</compile_context>

<pallas_src>
import functools

import numpy as np
import jax
import jax.numpy as jnp
from jax.experimental import pallas as pl
from jax.experimental.pallas import tpu as pltpu


_VMEM = pl.BlockSpec(memory_space=pltpu.MemorySpace.VMEM)
ATTN_PAD = 128      # lane-align additive-attention width (75 / 32 -> 128, zero-padded: exact)


# ----------------------------------------------------------------------------
# Small grid-less kernels (hoisted big projections)
# ----------------------------------------------------------------------------
def _matmul_kernel(x_ref, w_ref, o_ref):
    o_ref[...] = jnp.dot(x_ref[...], w_ref[...], preferred_element_type=jnp.float32)


def pallas_matmul(x, w):
    m, n = x.shape[0], w.shape[1]
    return pl.pallas_call(
        _matmul_kernel,
        out_shape=jax.ShapeDtypeStruct((m, n), jnp.float32),
        in_specs=[_VMEM, _VMEM], out_specs=_VMEM,
    )(x, w)


def _linear_kernel(x_ref, w_ref, b_ref, o_ref):
    o_ref[...] = (jnp.dot(x_ref[...], w_ref[...], preferred_element_type=jnp.float32)
                  + b_ref[...])


def pallas_linear(x, w, b):
    m, n = x.shape[0], w.shape[1]
    return pl.pallas_call(
        _linear_kernel,
        out_shape=jax.ShapeDtypeStruct((m, n), jnp.float32),
        in_specs=[_VMEM, _VMEM, _VMEM], out_specs=_VMEM,
    )(x, w, b)


# ----------------------------------------------------------------------------
# Shared in-kernel math helpers
# ----------------------------------------------------------------------------
def _gru_gates(gi, gh, h):
    """PyTorch nn.GRUCell with gates stacked [r|z|n] along the last axis."""
    hid = h.shape[-1]
    r = jax.nn.sigmoid(gi[:, :hid] + gh[:, :hid])
    z = jax.nn.sigmoid(gi[:, hid:2 * hid] + gh[:, hid:2 * hid])
    n = jnp.tanh(gi[:, 2 * hid:] + r * gh[:, 2 * hid:])
    return (1.0 - z) * n + z * h


def _attn_pool_math(kp, keys, qadd, v, mask):
    """Additive attention: score = v . tanh(Wk K + q), masked softmax, ctx = p @ K."""
    e = jnp.tanh(kp + qadd[:, None, :])                          # [B, Tk, A]
    s = jnp.sum(e * v[None, :, :], axis=-1)                      # [B, Tk]
    s = jnp.where(mask > 0.5, s, -1e30)
    m = jnp.max(s, axis=1, keepdims=True)
    p = jnp.exp(s - m) * mask
    denom = jnp.maximum(jnp.sum(p, axis=1, keepdims=True), 1e-20)  # empty-mask guard
    p = p * pl.reciprocal(denom, approx=True)                    # EUP, not VPU divide
    # Context via MXU batched contraction (mirrors bqk,bkd->bqd flash pattern).
    ctx = jnp.einsum('bqt,btk->bqk', p[:, None, :], keys,
                     preferred_element_type=jnp.float32)[:, 0, :]
    return ctx, p


# ----------------------------------------------------------------------------
# Fused GRU-over-time kernel (masked packed-sequence semantics)
# ----------------------------------------------------------------------------
def _gru_seq_kernel(gi_ref, m_ref, whh_ref, bh_ref, o_ref, hT_ref, h_sc):
    t = pl.program_id(0)

    @pl.when(t == 0)
    def _():
        h_sc[...] = jnp.zeros_like(h_sc)

    h = h_sc[...]
    gh = jnp.dot(h, whh_ref[...], preferred_element_type=jnp.float32) + bh_ref[...]
    hn = _gru_gates(gi_ref[0], gh, h)
    valid = m_ref[0]                                   # [B, 1]
    h_new = valid * hn + (1.0 - valid) * h
    h_sc[...] = h_new
    o_ref[0] = valid * h_new                           # padded steps emit zeros
    hT_ref[...] = h_new                                # last-valid hidden survives


def gru_seq_fused(x_tbd, lengths, gp, reverse=False):
    """One pallas_call for a whole (masked) GRU direction; returns (outs, h_last)."""
    T, B, IN = x_tbd.shape
    H = gp["whh"].shape[0]
    # Hoisted input projection: one big matmul instead of T tiny ones.
    gi = pallas_linear(x_tbd.reshape(T * B, IN), gp["wih"], gp["bi"]).reshape(T, B, 3 * H)
    mask = (jnp.arange(T, dtype=jnp.int32)[:, None] < lengths[None, :])
    mask = mask.astype(jnp.float32).reshape(T, B, 1)

    def tmap(t):
        return ((T - 1 - t) if reverse else t, 0, 0)

    const = lambda t: (0, 0)
    out, h_last = pl.pallas_call(
        _gru_seq_kernel,
        out_shape=(jax.ShapeDtypeStruct((T, B, H), jnp.float32),
                   jax.ShapeDtypeStruct((B, H), jnp.float32)),
        grid_spec=pltpu.PrefetchScalarGridSpec(
            num_scalar_prefetch=0, grid=(T,),
            in_specs=[pl.BlockSpec((1, B, 3 * H), tmap),
                      pl.BlockSpec((1, B, 1), tmap),
                      pl.BlockSpec((H, 3 * H), const),
                      pl.BlockSpec((1, 3 * H), const)],
            out_specs=[pl.BlockSpec((1, B, H), tmap),
                       pl.BlockSpec((B, H), const)],
            scratch_shapes=[pltpu.VMEM((B, H), jnp.float32)]),
        compiler_params=pltpu.CompilerParams(dimension_semantics=("arbitrary",)),
    )(gi, mask, gp["whh"], gp["bh"])
    return out, h_last


# ----------------------------------------------------------------------------
# Fused gated attention-based recurrent encoder (one direction = one kernel)
# ----------------------------------------------------------------------------
def _attn_enc_kernel(use_hidden, x_ref, pm_ref, kp_ref, keys_ref, km_ref,
                     wqx_ref, *rest):
    if use_hidden:
        (wqh_ref, v_ref, wg_ref, wih_ref, whh_ref, bi_ref, bh_ref,
         o_ref, h_sc) = rest
    else:
        wqh_ref = None
        (v_ref, wg_ref, wih_ref, whh_ref, bi_ref, bh_ref,
         o_ref, h_sc) = rest

    t = pl.program_id(0)

    @pl.when(t == 0)
    def _():
        h_sc[...] = jnp.zeros_like(h_sc)

    h = h_sc[...]
    xt = x_ref[0]                                      # [B, P]
    P = xt.shape[-1]

    qadd = jnp.dot(xt, wqx_ref[...], preferred_element_type=jnp.float32)
    if use_hidden:
        qadd = qadd + jnp.dot(h, wqh_ref[...], preferred_element_type=jnp.float32)

    ctx, _ = _attn_pool_math(kp_ref[...], keys_ref[...], qadd,
                             v_ref[...], km_ref[...])  # [B, K]

    # Gated input fusion (gated=True), split-weight form (no concatenate):
    #   g = sigmoid([xt, ctx] @ Wg);   gi = (g * [xt, ctx]) @ Wih + bi
    g = jax.nn.sigmoid(
        jnp.dot(xt, wg_ref[:P, :], preferred_element_type=jnp.float32)
        + jnp.dot(ctx, wg_ref[P:, :], preferred_element_type=jnp.float32))
    gx = g[:, :P] * xt
    gc = g[:, P:] * ctx
    gi = (jnp.dot(gx, wih_ref[:P, :], preferred_element_type=jnp.float32)
          + jnp.dot(gc, wih_ref[P:, :], preferred_element_type=jnp.float32)
          + bi_ref[...])
    gh = jnp.dot(h, whh_ref[...], preferred_element_type=jnp.float32) + bh_ref[...]
    hn = _gru_gates(gi, gh, h)

    valid = pm_ref[0]                                  # [B, 1]
    h_new = valid * hn + (1.0 - valid) * h
    h_sc[...] = h_new
    o_ref[0] = valid * h_new


def attention_encoder_dir(passage, plens, keys_tbk, key_mask_bt, p,
                          use_hidden, reverse):
    Tp, B, P = passage.shape
    Tk, _, K = keys_tbk.shape
    H = p["gru"]["whh"].shape[0]
    A = p["Wk"].shape[1]

    keys_btk = jnp.transpose(keys_tbk, (1, 0, 2))                  # [B, Tk, K]
    kp = pallas_matmul(keys_btk.reshape(B * Tk, K), p["Wk"]).reshape(B, Tk, A)
    pmask = (jnp.arange(Tp, dtype=jnp.int32)[:, None] < plens[None, :])
    pmask = pmask.astype(jnp.float32).reshape(Tp, B, 1)

    def tmap(t):
        return ((Tp - 1 - t) if reverse else t, 0, 0)

    c2 = lambda t: (0, 0)
    c3 = lambda t: (0, 0, 0)

    in_specs = [pl.BlockSpec((1, B, P), tmap),         # x_t (streamed)
                pl.BlockSpec((1, B, 1), tmap),         # validity mask_t
                pl.BlockSpec((B, Tk, A), c3),          # kp     (VMEM-resident)
                pl.BlockSpec((B, Tk, K), c3),          # keys   (VMEM-resident)
                pl.BlockSpec((B, Tk), c2),             # key mask
                pl.BlockSpec((P, A), c2)]              # Wq_x
    args = [passage, pmask, kp, keys_btk, key_mask_bt, p["Wq_x"]]
    if use_hidden:
        in_specs.append(pl.BlockSpec((H, A), c2))
        args.append(p["Wq_h"])
    in_specs += [pl.BlockSpec((1, A), c2),             # v
                 pl.BlockSpec((P + K, P + K), c2),     # Wg
                 pl.BlockSpec((P + K, 3 * H), c2),     # Wih (stacked gates)
                 pl.BlockSpec((H, 3 * H), c2),         # Whh (stacked gates)
                 pl.BlockSpec((1, 3 * H), c2),         # bi
                 pl.BlockSpec((1, 3 * H), c2)]         # bh
    args += [p["v"], p["Wg"], p["gru"]["wih"], p["gru"]["whh"],
             p["gru"]["bi"], p["gru"]["bh"]]

    return pl.pallas_call(
        functools.partial(_attn_enc_kernel, use_hidden),
        out_shape=jax.ShapeDtypeStruct((Tp, B, H), jnp.float32),
        grid_spec=pltpu.PrefetchScalarGridSpec(
            num_scalar_prefetch=0, grid=(Tp,),
            in_specs=in_specs,
            out_specs=pl.BlockSpec((1, B, H), tmap),
            scratch_shapes=[pltpu.VMEM((B, H), jnp.float32)]),
        compiler_params=pltpu.CompilerParams(dimension_semantics=("arbitrary",)),
    )(*args)


def attention_encoder(passage, plens, keys, key_mask, p_fwd, p_bwd, use_hidden):
    # TODO(synk): residual / non-GRU cell modes of AttentionEncoder not needed
    # for the reference config (residual=False, mode='GRU') and are omitted.
    of = attention_encoder_dir(passage, plens, keys, key_mask, p_fwd,
                               use_hidden, reverse=False)
    ob = attention_encoder_dir(passage, plens, keys, key_mask, p_bwd,
                               use_hidden, reverse=True)
    return jnp.concatenate([of, ob], axis=-1)


# ----------------------------------------------------------------------------
# Fused pointer network (single kernel)
# ----------------------------------------------------------------------------
def _pointer_kernel(q_ref, kpq_ref, qmask_ref, p_ref, kpp_ref, pmask_ref,
                    vq_ref, qwq_ref, qv_ref, pwq_ref, pv_ref,
                    wih_ref, whh_ref, bi_ref, bh_ref,
                    begin_ref, end_ref):
    B = q_ref.shape[0]

    # Question pooling with learned query V_q (broadcast over batch).
    vq_add = jnp.dot(vq_ref[...], qwq_ref[...], preferred_element_type=jnp.float32)
    qadd0 = jnp.broadcast_to(vq_add, (B, vq_add.shape[1]))
    hidden, _ = _attn_pool_math(kpq_ref[...], q_ref[...], qadd0,
                                qv_ref[...], qmask_ref[...])           # [B, Qs]

    # Passage pooling -> answer-begin scores + pooled input for the cell.
    qadd1 = jnp.dot(hidden, pwq_ref[...], preferred_element_type=jnp.float32)
    ctx, begin = _attn_pool_math(kpp_ref[...], p_ref[...], qadd1,
                                 pv_ref[...], pmask_ref[...])

    # One GRU step of the answer-pointer recurrence.
    gi = jnp.dot(ctx, wih_ref[...], preferred_element_type=jnp.float32) + bi_ref[...]
    gh = jnp.dot(hidden, whh_ref[...], preferred_element_type=jnp.float32) + bh_ref[...]
    hidden2 = _gru_gates(gi, gh, hidden)

    qadd2 = jnp.dot(hidden2, pwq_ref[...], preferred_element_type=jnp.float32)
    _, end = _attn_pool_math(kpp_ref[...], p_ref[...], qadd2,
                             pv_ref[...], pmask_ref[...])

    begin_ref[...] = begin
    end_ref[...] = end


def pointer_network(question_pad, qmask_bt, passage_pad, pmask_bt, p):
    Tq, B, Qs = question_pad.shape
    Tp, _, Ps = passage_pad.shape
    A = p["q_Wk"].shape[1]
    q_btk = jnp.transpose(question_pad, (1, 0, 2))
    p_btk = jnp.transpose(passage_pad, (1, 0, 2))
    kp_q = pallas_matmul(q_btk.reshape(B * Tq, Qs), p["q_Wk"]).reshape(B, Tq, A)
    kp_p = pallas_matmul(p_btk.reshape(B * Tp, Ps), p["p_Wk"]).reshape(B, Tp, A)

    begin, end = pl.pallas_call(
        _pointer_kernel,
        out_shape=(jax.ShapeDtypeStruct((B, Tp), jnp.float32),
                   jax.ShapeDtypeStruct((B, Tp), jnp.float32)),
        in_specs=[_VMEM] * 15,
        out_specs=(_VMEM, _VMEM),
    )(q_btk, kp_q, qmask_bt, p_btk, kp_p, pmask_bt,
      p["V_q"].reshape(1, Qs), p["q_Wq"], p["q_v"], p["p_Wq"], p["p_v"],
      p["cell"]["wih"], p["cell"]["whh"], p["cell"]["bi"], p["cell"]["bh"])
    # TODO(synk): repo returns masked attention scores (pre/post log-softmax
    # depending on version); we return the masked softmax probabilities.
    return begin, end


# ----------------------------------------------------------------------------
# Parameter init (deterministic, synthetic)
# ----------------------------------------------------------------------------
def _randn(key, shape, scale=0.1):
    return scale * jax.random.normal(key, shape, dtype=jnp.float32)


def _randn_padded(key, shape, pad_to, scale=0.1):
    """Random [..., d] matrix zero-padded along the last axis (math-preserving)."""
    x = _randn(key, shape, scale)
    pad = pad_to - shape[-1]
    if pad > 0:
        x = jnp.pad(x, [(0, 0)] * (x.ndim - 1) + [(0, pad)])
    return x


def init_gru(key, in_dim, hid):
    # Gates stacked [r|z|n] along the last axis (PyTorch nn.GRUCell order).
    k = jax.random.split(key, 4)
    return {"wih": _randn(k[0], (in_dim, 3 * hid)),
            "whh": _randn(k[1], (hid, 3 * hid)),
            "bi": _randn(k[2], (1, 3 * hid)),
            "bh": _randn(k[3], (1, 3 * hid))}


def init_attn_cell(key, key_size, x_size, hid, use_hidden, attn=75):
    ks = jax.random.split(key, 6)
    d = {"Wk": _randn_padded(ks[0], (key_size, attn), ATTN_PAD),
         "Wq_x": _randn_padded(ks[1], (x_size, attn), ATTN_PAD),
         "v": _randn_padded(ks[2], (1, attn), ATTN_PAD),
         "Wg": _randn(ks[3], (x_size + key_size, x_size + key_size)),
         "gru": init_gru(ks[4], x_size + key_size, hid)}
    if use_hidden:
        d["Wq_h"] = _randn_padded(ks[5], (hid, attn), ATTN_PAD)
    return d


def init_params(key):
    keys = iter(jax.random.split(key, 64))
    nk = lambda: next(keys)

    char_vocab, char_dim, char_out = 20, 8, 8
    word_vocab, word_dim = 30, 16
    emb_size = word_dim + char_out            # 24
    sent_hidden = 16
    enc_size = 2 * sent_hidden                # 32 (bidirectional)
    pair_hidden = 16
    pair_out = 2 * pair_hidden                # 32
    self_hidden = 16
    self_out = 2 * self_hidden                # 32

    char_emb = _randn(nk(), (char_vocab, char_dim)).at[0].set(0.0)   # padding_idx=0
    word_emb = _randn(nk(), (word_vocab, word_dim)).at[0].set(0.0)   # padding_idx=0

    p = {
        "embedding": {
            "char_emb": char_emb,
            "word_emb": word_emb,
            # TODO(synk): exact CharLevelEmbedding internals (projection /
            # bidirectionality) follow the repo default of a unidirectional
            # GRU whose final hidden state is the char-level word embedding.
            "char_gru": init_gru(nk(), char_dim, char_out),
        },
        "sent_q_fwd": init_gru(nk(), emb_size, sent_hidden),
        "sent_q_bwd": init_gru(nk(), emb_size, sent_hidden),
        "sent_p_fwd": init_gru(nk(), emb_size, sent_hidden),
        "sent_p_bwd": init_gru(nk(), emb_size, sent_hidden),
        "pair_fwd": init_attn_cell(nk(), enc_size, enc_size, pair_hidden, True),
        "pair_bwd": init_attn_cell(nk(), enc_size, enc_size, pair_hidden, True),
        "self_fwd": init_attn_cell(nk(), pair_out, pair_out, self_hidden, False),
        "self_bwd": init_attn_cell(nk(), pair_out, pair_out, self_hidden, False),
    }

    qsize, psize = enc_size, self_out         # both 32 (as in R-Net configs)
    pattn = qsize
    p["pointer"] = {
        "q_Wk": _randn_padded(nk(), (qsize, pattn), ATTN_PAD),
        "q_Wq": _randn_padded(nk(), (qsize, pattn), ATTN_PAD),
        "q_v": _randn_padded(nk(), (1, pattn), ATTN_PAD),
        "V_q": _randn(nk(), (1, 1, qsize)),
        "p_Wk": _randn_padded(nk(), (psize, pattn), ATTN_PAD),
        "p_Wq": _randn_padded(nk(), (qsize, pattn), ATTN_PAD),
        "p_v": _randn_padded(nk(), (1, pattn), ATTN_PAD),
        "cell": init_gru(nk(), psize, qsize),
    }
    return p


# ----------------------------------------------------------------------------
# Documents glue (sorting by length, masks) -- plain JAX
# ----------------------------------------------------------------------------
class Documents:
    def __init__(self, tensor, tensor_new_dx, lengths):
        lengths_np = np.asarray(lengths)
        order = np.argsort(-lengths_np, kind="stable")
        self.sorted_idx = jnp.asarray(order, dtype=jnp.int32)
        self.restore_idx = jnp.asarray(np.argsort(order, kind="stable"),
                                       dtype=jnp.int32)
        self.tensor = jnp.take(jnp.asarray(tensor), self.sorted_idx, axis=0)
        self.tensor_new_dx = jnp.take(jnp.asarray(tensor_new_dx),
                                      self.sorted_idx, axis=0)
        self.lengths = jnp.take(jnp.asarray(lengths_np, dtype=jnp.int32),
                                self.sorted_idx, axis=0)
        t = np.asarray(tensor).shape[1]
        self.mask_original = (jnp.arange(t)[None, :] <
                              jnp.asarray(lengths_np)[:, None]).astype(jnp.float32)

    def to_sorted_order(self, x, batch_dim):
        return jnp.take(x, self.sorted_idx, axis=batch_dim)

    def restore_original_order(self, x, batch_dim):
        return jnp.take(x, self.restore_idx, axis=batch_dim)


# ----------------------------------------------------------------------------
# Model pieces (JAX glue calling fused Pallas kernels)
# ----------------------------------------------------------------------------
def bi_gru(x_tbd, lengths, p_fwd, p_bwd):
    of, _ = gru_seq_fused(x_tbd, lengths, p_fwd, reverse=False)
    ob, _ = gru_seq_fused(x_tbd, lengths, p_bwd, reverse=True)
    return jnp.concatenate([of, ob], axis=-1)


def char_level_embedding(words_tensor, words_lengths, emb_params):
    emb = jnp.take(emb_params["char_emb"], words_tensor, axis=0)   # [W, L, Cd]
    x = jnp.transpose(emb, (1, 0, 2))                              # [L, W, Cd]
    _, h_last = gru_seq_fused(x, words_lengths, emb_params["char_gru"])
    return h_last                                                  # [W, Cout]


def word_embedding(emb_params, words, *docs):
    char_embedded = char_level_embedding(words["words_tensor"],
                                         words["words_lengths"], emb_params)
    result = []
    for doc in docs:
        wl = jnp.take(emb_params["word_emb"], doc.tensor, axis=0)  # [B, T, Wd]
        idx = doc.tensor_new_dx.reshape(-1)
        cl = jnp.take(char_embedded, idx, axis=0).reshape(
            doc.tensor.shape[0], doc.tensor.shape[1], -1)          # [B, T, Cout]
        result.append(jnp.concatenate([wl, cl], axis=2))
    return result


def rnet_forward(params, words, question, passage):
    # Word + char embedding (each doc in its own sorted order, batch-first)
    emb_q, emb_p = word_embedding(params["embedding"], words, question, passage)

    # Sentence encoding (time-major, packed-sequence semantics via masking)
    q_x = jnp.transpose(emb_q, (1, 0, 2))
    p_x = jnp.transpose(emb_p, (1, 0, 2))
    q_enc = bi_gru(q_x, question.lengths, params["sent_q_fwd"], params["sent_q_bwd"])
    p_enc = bi_gru(p_x, passage.lengths, params["sent_p_fwd"], params["sent_p_bwd"])

    # Reorder the question to the passage's sorted batch order
    q_enc_orig = question.restore_original_order(q_enc, batch_dim=1)
    q_in_p = passage.to_sorted_order(q_enc_orig, batch_dim=1)            # [Tq,B,32]
    q_mask_in_p = passage.to_sorted_order(question.mask_original, 0)     # [B, Tq]
    p_mask_sorted = passage.to_sorted_order(passage.mask_original, 0)    # [B, Tp]

    # Pair encoding (gated attention GRU over question)
    paired = attention_encoder(p_enc, passage.lengths, q_in_p, q_mask_in_p,
                               params["pair_fwd"], params["pair_bwd"],
                               use_hidden=True)                          # [Tp,B,32]

    # Self-matching attention over the paired passage
    self_matched = attention_encoder(paired, passage.lengths, paired,
                                     p_mask_sorted, params["self_fwd"],
                                     params["self_bwd"], use_hidden=False)

    # Pointer network
    begin, end = pointer_network(q_in_p, q_mask_in_p, self_matched,
                                 p_mask_sorted, params["pointer"])

    return (passage.restore_original_order(begin, 0),
            passage.restore_original_order(end, 0))


# ----------------------------------------------------------------------------
# Main
# ----------------------------------------------------------------------------
if __name__ == "__main__":
    key = jax.random.PRNGKey(0)
    ks = jax.random.split(key, 10)
    params = init_params(ks[0])

    B, Tq, Tp = 2, 6, 8
    n_words, Lc = 10, 5
    words = {
        "words_tensor": jax.random.randint(ks[1], (n_words, Lc), 1, 20),
        "words_lengths": jnp.array([5, 3, 4, 5, 2, 5, 3, 4, 5, 1], jnp.int32),
    }
    q_tensor = jax.random.randint(ks[2], (B, Tq), 1, 30)
    q_newdx = jax.random.randint(ks[3], (B, Tq), 0, n_words)
    q_lengths = np.array([6, 4], dtype=np.int32)
    p_tensor = jax.random.randint(ks[4], (B, Tp), 1, 30)
    p_newdx = jax.random.randint(ks[5], (B, Tp), 0, n_words)
    p_lengths = np.array([5, 8], dtype=np.int32)

    question = Documents(q_tensor, q_newdx, q_lengths)
    passage = Documents(p_tensor, p_newdx, p_lengths)

    begin, end = rnet_forward(params, words, question, passage)
    begin = jax.block_until_ready(begin)
    end = jax.block_until_ready(end)

    assert begin.shape == (B, Tp) and end.shape == (B, Tp)
    assert bool(jnp.all(jnp.isfinite(begin))) and bool(jnp.all(jnp.isfinite(end)))
    print("KERNEL_OK")
</pallas_src>

<mosaic_0001>
module attributes {stable_mosaic.version = 11 : i64} {
  func.func @_linear_kernel(%arg0: memref<50x8xf32, #tpu.memory_space<vmem>>, %arg1: memref<8x24xf32, #tpu.memory_space<vmem>>, %arg2: memref<1x24xf32, #tpu.memory_space<vmem>>, %arg3: memref<50x24xf32, #tpu.memory_space<vmem>>) attributes {dimension_semantics = [], scalar_prefetch = 0 : i64, scratch_operands = 0 : i64, tpu.core_type = #tpu.core_type<tc>} {
    %c0 = arith.constant 0 : index
    %c0_0 = arith.constant 0 : index
    %0 = vector.load %arg0[%c0, %c0_0] : memref<50x8xf32, #tpu.memory_space<vmem>>, vector<50x8xf32>
    %c0_1 = arith.constant 0 : index
    %c0_2 = arith.constant 0 : index
    %1 = vector.load %arg1[%c0_1, %c0_2] : memref<8x24xf32, #tpu.memory_space<vmem>>, vector<8x24xf32>
    %cst = arith.constant dense<0.000000e+00> : vector<50x24xf32>
    %2 = tpu.matmul %0, %1, %cst {dimension_numbers = #tpu.dot_dimension_numbers<[1], [0], [0], [1], [0, 0, 1, 1], [], []>} : vector<50x8xf32>, vector<8x24xf32>, vector<50x24xf32> -> vector<50x24xf32>
    %c0_3 = arith.constant 0 : index
    %c0_4 = arith.constant 0 : index
    %3 = vector.load %arg2[%c0_3, %c0_4] : memref<1x24xf32, #tpu.memory_space<vmem>>, vector<1x24xf32>
    %4 = vector.broadcast %3 : vector<1x24xf32> to vector<50x24xf32>
    %5 = arith.addf %2, %4 : vector<50x24xf32>
    %c0_5 = arith.constant 0 : index
    %c0_6 = arith.constant 0 : index
    %6 = vector.load %arg3[%c0_5, %c0_6] : memref<50x24xf32, #tpu.memory_space<vmem>>, vector<50x24xf32>
    tpu.vector_store %arg3[%c0_5, %c0_6], %5 {strides = array<i32>} : memref<50x24xf32, #tpu.memory_space<vmem>>, vector<50x24xf32>,
    return
  }
}

</mosaic_0001>

<llo_original>
// kernel: tpu_custom_call.1
$region0: #{tpu_custom_call.1}
  #allocation0 [shape = 'u32[]', space=smem, size = 0x4, offset = 0x4, fixed_abs, tag = 'smem constant byte address 0x4 - core index']
  #allocation1 [shape = 'u32[144,128]{1,0:T(1,128)}', space=vmem, size = 0x12000, scoped, tag = 'internal scratch']
  %s0 = inlined_call_operand.vmem [shape: f32[50,8], index: 0, kind: input, shape index: {}]
  %s1 = inlined_call_operand.vmem [shape: f32[8,24], index: 1, kind: input, shape index: {}]
  %s2 = inlined_call_operand.vmem [shape: f32[1,24], index: 2, kind: input, shape index: {}]
  %s3 = inlined_call_operand.vmem [shape: f32[50,24], index: 3, kind: output, shape index: {}]
  %s4 = sld [smem:[#allocation0]]
  $region22: #{tpu_custom_call.1} parent=0
    _
  %s6 = ssub.s32 1, %s4
  %s7 = scalar_select 0, %s6, %s4
  // Predicated region
  $region2: #{tpu_custom_call.1} parent=0 // pred_check
    _
  $region3: #{tpu_custom_call.1} parent=0 // pred_check_branch
    %9 = sbr.rel (0) target = $region5
  $region4: #{tpu_custom_call.1} parent=0 // pred_region
    _
  $region5: #{tpu_custom_call.1} parent=0 // pred_fallthru
    _
  // Predicated region
  $region6: #{tpu_custom_call.1} parent=0 // pred_check
    _
  $region7: #{tpu_custom_call.1} parent=0 // pred_check_branch
    %11 = sbr.rel (0) target = $region9
  $region8: #{tpu_custom_call.1} parent=0 // pred_region
    _
  $region9: #{tpu_custom_call.1} parent=0 // pred_fallthru
    _
  // Predicated region
  $region10: #{tpu_custom_call.1} parent=0 // pred_check
    _
  $region11: #{tpu_custom_call.1} parent=0 // pred_check_branch
    %13 = sbr.rel (0) target = $region13
  $region12: #{tpu_custom_call.1} parent=0 // pred_region
    _
  $region13: #{tpu_custom_call.1} parent=0 // pred_fallthru
    _
  %v14 = vld [vmem:[%s0] sm:$0xff]
  %v15 = vld [vmem:[%s0 + $0x8] sm:$0xff]
  %v16 = vld [vmem:[%s0 + $0x10] sm:$0xff]
  %v17 = vld [vmem:[%s0 + $0x18] sm:$0xff]
  %v18 = vld [vmem:[%s0 + $0x20] sm:$0xff]
  %v19 = vld [vmem:[%s0 + $0x28] sm:$0xff]
  %v20 = vld [vmem:[%s0 + $0x30] sm:$0x3]
  %v21 = vld [vmem:[%s1] sm:$0xff]
  %v22 = vld [vmem:[%s2] sm:$0x1]
  %v24 = vlaneseq
  %v25 = vshrl.u32 %v24, 7
  %v26 = vsub.s32 0, %v25
  %v27 = vrot.slane %v22, %v26
  %vm29 = vcmask 64512
  %v31 = vsel %vm29, %v14, 0
  %v34 = vsel %vm29, %v15, 0
  %v37 = vsel %vm29, %v16, 0
  %v40 = vsel %vm29, %v17, 0
  %v43 = vsel %vm29, %v18, 0
  %v46 = vsel %vm29, %v19, 0
  %v49 = vsel %vm29, %v20, 0
  %51 = vmatprep.subr.mxu0 0.0
  %52 = vmatpush1.msra.mxu0 %v21
  %53 = vmatprep.subr.mxu0 0.0
  %54 = vmatpush1.msra.mxu0 0.0
  %55 = vmatprep.subr.mxu0 0.0
  %56 = vmatpush1.msra.mxu0 0.0
  %57 = vmatprep.subr.mxu0 0.0
  %58 = vmatpush1.msra.mxu0 0.0
  %59 = vmatprep.subr.mxu0 0.0
  %60 = vmatpush1.msra.mxu0 0.0
  %61 = vmatprep.subr.mxu0 0.0
  %62 = vmatpush1.msra.mxu0 0.0
  %63 = vmatprep.subr.mxu0 0.0
  %64 = vmatpush1.msra.mxu0 0.0
  %65 = vmatprep.subr.mxu0 0.0
  %66 = vmatpush1.msra.mxu0 0.0
  %67 = vmatprep.subr.mxu0 0.0
  %68 = vmatpush1.msra.mxu0 0.0
  %69 = vmatprep.subr.mxu0 0.0
  %70 = vmatpush1.msra.mxu0 0.0
  %71 = vmatprep.subr.mxu0 0.0
  %72 = vmatpush1.msra.mxu0 0.0
  %73 = vmatprep.subr.mxu0 0.0
  %74 = vmatpush1.msra.mxu0 0.0
  %75 = vmatprep.subr.mxu0 0.0
  %76 = vmatpush1.msra.mxu0 0.0
  %77 = vmatprep.subr.mxu0 0.0
  %78 = vmatpush1.msra.mxu0 0.0
  %79 = vmatprep.subr.mxu0 0.0
  %80 = vmatpush1.msra.mxu0 0.0
  %81 = vmatprep.subr.mxu0 0.0
  %82 = vmatpush1.msra.mxu0 0.0
  %83 = vmatprep.subr.mxu0 0.0
  %84 = vmatpush1.msra.mxu0 0.0
  %85 = vmatprep.subr.mxu0 0.0
  %86 = vmatpush1.msra.mxu0 0.0
  %87 = vmatprep.subr.mxu0 0.0
  %88 = vmatpush1.msra.mxu0 0.0
  %89 = vmatprep.subr.mxu0 0.0
  %90 = vmatpush1.msra.mxu0 0.0
  %91 = vmatprep.subr.mxu0 0.0
  %92 = vmatpush1.msra.mxu0 0.0
  %93 = vmatprep.subr.mxu0 0.0
  %94 = vmatpush1.msra.mxu0 0.0
  %95 = vmatprep.subr.mxu0 0.0
  %96 = vmatpush1.msra.mxu0 0.0
  %97 = vmatprep.subr.mxu0 0.0
  %98 = vmatpush1.msra.mxu0 0.0
  %99 = vmatprep.subr.mxu0 0.0
  %100 = vmatpush1.msra.mxu0 0.0
  %101 = vmatprep.subr.mxu0 0.0
  %102 = vmatpush1.msra.mxu0 0.0
  %103 = vmatprep.subr.mxu0 0.0
  %104 = vmatpush1.msra.mxu0 0.0
  %105 = vmatprep.subr.mxu0 0.0
  %106 = vmatpush1.msra.mxu0 0.0
  %107 = vmatprep.subr.mxu0 0.0
  %108 = vmatpush1.msra.mxu0 0.0
  %109 = vmatprep.subr.mxu0 0.0
  %110 = vmatpush1.msra.mxu0 0.0
  %111 = vmatprep.subr.mxu0 0.0
  %112 = vmatpush1.msra.mxu0 0.0
  %113 = vmatprep.subr.mxu0 0.0
  %114 = vmatpush1.msra.mxu0 0.0
  %115 = vmatprep.mubr.f32.mxu0 0.0
  %116 = vmatmul.mubr.f32.gmra.mrb[0].mxu0 %v31
  %v117 = vpop.f32.mrb[0].mxu0
  %v118 = vadd.f32 %v27, %v117
  %v119 = vpop.f32.mrb[0].mxu0
  %120 = vmatprep.mubr.f32.mxu0 0.0
  %121 = vmatmul.mubr.f32.gmra.mrb[0].mxu0 %v34
  %v122 = vpop.f32.mrb[0].mxu0
  %v123 = vadd.f32 %v27, %v122
  %v124 = vpop.f32.mrb[0].mxu0
  %125 = vmatprep.mubr.f32.mxu0 0.0
  %126 = vmatmul.mubr.f32.gmra.mrb[0].mxu0 %v37
  %v127 = vpop.f32.mrb[0].mxu0
  %v128 = vadd.f32 %v27, %v127
  %v129 = vpop.f32.mrb[0].mxu0
  %130 = vmatprep.mubr.f32.mxu0 0.0
  %131 = vmatmul.mubr.f32.gmra.mrb[0].mxu0 %v40
  %v132 = vpop.f32.mrb[0].mxu0
  %v133 = vadd.f32 %v27, %v132
  %v134 = vpop.f32.mrb[0].mxu0
  %135 = vmatprep.mubr.f32.mxu0 0.0
  %136 = vmatmul.mubr.f32.gmra.mrb[0].mxu0 %v43
  %v137 = vpop.f32.mrb[0].mxu0
  %v138 = vadd.f32 %v27, %v137
  %v139 = vpop.f32.mrb[0].mxu0
  %140 = vmatprep.mubr.f32.mxu0 0.0
  %141 = vmatmul.mubr.f32.gmra.mrb[0].mxu0 %v46
  %v142 = vpop.f32.mrb[0].mxu0
  %v143 = vadd.f32 %v27, %v142
  %v144 = vpop.f32.mrb[0].mxu0
  %145 = vmatprep.mubr.f32.mxu0 0.0
  %146 = vmatmul.mubr.f32.gmra.mrb[0].mxu0 %v49
  %v147 = vpop.f32.mrb[0].mxu0
  %v148 = vadd.f32 %v27, %v147
  %v149 = vpop.f32.mrb[0].mxu0
  %150 = vdwg.mxu0
  %vm151 = vcmask 195584
  %152 = vst.msk [vmem:[%s3] sm:$0xff] %vm151, %v118
  %153 = vst.msk [vmem:[%s3 + $0x8] sm:$0xff] %vm151, %v123
  %154 = vst.msk [vmem:[%s3 + $0x10] sm:$0xff] %vm151, %v128
  %155 = vst.msk [vmem:[%s3 + $0x18] sm:$0xff] %vm151, %v133
  %156 = vst.msk [vmem:[%s3 + $0x20] sm:$0xff] %vm151, %v138
  %157 = vst.msk [vmem:[%s3 + $0x28] sm:$0xff] %vm151, %v143
  %vm158 = vcmask 189440
  %159 = vst.msk [vmem:[%s3 + $0x30] sm:$0x3] %vm158, %v148
  // Predicated region
  $region14: #{tpu_custom_call.1} parent=0 // pred_check
    _
  $region15: #{tpu_custom_call.1} parent=0 // pred_check_branch
    %161 = sbr.rel (0) target = $region17
  $region16: #{tpu_custom_call.1} parent=0 // pred_region
    _
  $region17: #{tpu_custom_call.1} parent=0 // pred_fallthru
    _
  // Predicated region
  $region18: #{tpu_custom_call.1} parent=0 // pred_check
    _
  $region19: #{tpu_custom_call.1} parent=0 // pred_check_branch
    %163 = sbr.rel (0) target = $region21
  $region20: #{tpu_custom_call.1} parent=0 // pred_region
    _
  $region21: #{tpu_custom_call.1} parent=0 // pred_fallthru
    _

</llo_original>
